<compile_context>
chip_gen: v6e
topology: v6e:2x2x1
jax: 0.10.0
libtpu: 0.0.40
codegen_flags: <defaults>
</compile_context>

<pallas_src>
import jax
import jax.numpy as jnp
from jax.experimental import pallas as pl
from jax.experimental.pallas import tpu as pltpu


def _lambda_kernel(x_ref, o_ref):
    # Elementwise handler: x * sigmoid(x). Compute in f32, cast to out dtype.
    x32 = x_ref[...].astype(jnp.float32)
    o_ref[...] = (x32 * jax.nn.sigmoid(x32)).astype(o_ref.dtype)


def _sublane_packing(dtype):
    # 8 rows per vreg for 32-bit, 16 for 16-bit, 32 for 8-bit dtypes.
    itemsize = jnp.dtype(dtype).itemsize
    return max(8, 32 // max(itemsize, 1))


def _round_up(x, m):
    return -(-x // m) * m


def lambda_forward(x, *, target_block_bytes=2 * 1024 * 1024):
    """Apply the Lambda module's handler (elementwise) via a tiled Pallas kernel.

    x: any-shape float array (module is layout-agnostic / pure elementwise).
    """
    orig_shape = x.shape
    orig_dtype = x.dtype
    n = x.size

    # Widest lane slab that divides n (avoids pad/slice copies when possible).
    lanes = None
    for cand in (1024, 512, 256, 128):
        if n % cand == 0:
            lanes = cand
            break

    flat = jnp.reshape(x, (-1,))
    if lanes is None:
        # Fallback for awkward sizes: pad the tail to a 128-lane multiple.
        lanes = 128
        n_pad = _round_up(n, lanes)
        flat = jnp.pad(flat, (0, n_pad - n))
    else:
        n_pad = n

    rows = n_pad // lanes
    x2d = jnp.reshape(flat, (rows, lanes))

    # Tile rows so each block is ~target_block_bytes. With double-buffered
    # input + output that is ~4x the block in VMEM -> well under limits on
    # v5e/v6e (128 MiB) and v7x (64 MiB).
    pack = _sublane_packing(orig_dtype)
    row_bytes = lanes * jnp.dtype(orig_dtype).itemsize
    tile_r = max(pack, target_block_bytes // row_bytes)
    tile_r = _round_up(min(tile_r, rows), pack)

    grid = (pl.cdiv(rows, tile_r),)

    out2d = pl.pallas_call(
        _lambda_kernel,
        out_shape=jax.ShapeDtypeStruct((rows, lanes), orig_dtype),
        grid=grid,
        in_specs=[pl.BlockSpec((tile_r, lanes), lambda i: (i, 0))],
        out_specs=pl.BlockSpec((tile_r, lanes), lambda i: (i, 0)),
        compiler_params=pltpu.CompilerParams(
            dimension_semantics=("parallel",)),
    )(x2d)

    out_flat = jnp.reshape(out2d, (-1,))
    if n_pad != n:
        out_flat = out_flat[:n]
    return jnp.reshape(out_flat, orig_shape)


def _silu_ref(x):
    x32 = x.astype(jnp.float32)
    return (x32 * jax.nn.sigmoid(x32)).astype(x.dtype)


if __name__ == "__main__":
    key = jax.random.PRNGKey(0)

    # 1) Small NCHW input consistent with typical NCA usage (f32, divisible).
    x = jax.random.normal(key, (2, 4, 16, 16), dtype=jnp.float32)
    out = lambda_forward(x)
    jax.block_until_ready(out)
    ref = _silu_ref(x)
    assert out.shape == x.shape and out.dtype == x.dtype
    assert jnp.allclose(out, ref, atol=1e-5, rtol=1e-5)

    # 2) Awkward size (not a multiple of 128) -> exercises the pad fallback.
    k1, k2 = jax.random.split(key)
    x_odd = jax.random.normal(k1, (3, 5, 7), dtype=jnp.float32)
    out_odd = lambda_forward(x_odd)
    jax.block_until_ready(out_odd)
    assert jnp.allclose(out_odd, _silu_ref(x_odd), atol=1e-5, rtol=1e-5)

    # 3) bf16 input -> f32 math in-kernel, dtype-appropriate tolerance.
    x_bf = jax.random.normal(k2, (2, 4, 16, 16), dtype=jnp.bfloat16)
    out_bf = lambda_forward(x_bf)
    jax.block_until_ready(out_bf)
    assert out_bf.dtype == jnp.bfloat16
    assert jnp.allclose(out_bf.astype(jnp.float32),
                        _silu_ref(x_bf).astype(jnp.float32),
                        atol=2e-2, rtol=2e-2)

    print("KERNEL_OK")
</pallas_src>

<mosaic_0001>
module attributes {stable_mosaic.version = 11 : i64} {
  func.func @_lambda_kernel(%arg0: i32, %arg1: memref<8x1024xf32, #tpu.memory_space<vmem>>, %arg2: memref<8x1024xf32, #tpu.memory_space<vmem>>) attributes {dimension_semantics = [#tpu.dimension_semantics<parallel>], iteration_bounds = array<i64: 1>, scalar_prefetch = 0 : i64, scratch_operands = 0 : i64, tpu.core_type = #tpu.core_type<tc>, window_params = [{transform_indices = @transform_0, window_bounds = array<i64: 8, 1024>}, {transform_indices = @transform_1, window_bounds = array<i64: 8, 1024>}]} {
    %c0 = arith.constant 0 : index
    %c0_0 = arith.constant 0 : index
    %0 = vector.load %arg1[%c0, %c0_0] : memref<8x1024xf32, #tpu.memory_space<vmem>>, vector<8x1024xf32>
    %1 = arith.negf %0 : vector<8x1024xf32>
    %2 = math.exp %1 : vector<8x1024xf32>
    %cst = arith.constant 1.000000e+00 : f32
    %3 = vector.broadcast %cst : f32 to vector<8x1024xf32>
    %4 = arith.addf %3, %2 : vector<8x1024xf32>
    %5 = arith.divf %3, %4 : vector<8x1024xf32>
    %6 = arith.mulf %0, %5 : vector<8x1024xf32>
    %c0_1 = arith.constant 0 : index
    %c0_2 = arith.constant 0 : index
    %7 = vector.load %arg2[%c0_1, %c0_2] : memref<8x1024xf32, #tpu.memory_space<vmem>>, vector<8x1024xf32>
    tpu.vector_store %arg2[%c0_1, %c0_2], %6 {strides = array<i32>} : memref<8x1024xf32, #tpu.memory_space<vmem>>, vector<8x1024xf32>,
    return
  }
  func.func @transform_0(%arg0: i32) -> (i32, i32) {
    %c0_i32 = arith.constant 0 : i32
    %c0_i32_0 = arith.constant 0 : i32
    return %arg0, %c0_i32 : i32, i32
  }
  func.func @transform_1(%arg0: i32) -> (i32, i32) {
    %c0_i32 = arith.constant 0 : i32
    %c0_i32_0 = arith.constant 0 : i32
    return %arg0, %c0_i32 : i32, i32
  }
}

</mosaic_0001>

<llo_original>
// kernel: tpu_custom_call.1
$region0: #{tpu_custom_call.1}
  #allocation0 [shape = 'u32[]', space=smem, size = 0x4, offset = 0x4, fixed_abs, tag = 'smem constant byte address 0x4 - core index']
  #allocation1 [shape = 'u32[144,128]{1,0:T(1,128)}', space=vmem, size = 0x12000, scoped, tag = 'internal scratch']
  %s0 = inlined_call_operand.hbm [shape: f32[2,1024], index: 0, kind: input, shape index: {}]
  %s1 = inlined_call_operand.hbm [shape: f32[2,1024], index: 1, kind: output, shape index: {}]
  %s2 = sld [smem:[#allocation0]]
  $region18: #{tpu_custom_call.1} parent=0
    _
  %s4 = ssub.s32 1, %s2
  %s5 = scalar_select 0, %s4, %s2
  $region1: #{tpu_custom_call.1} parent=0
    #allocation2 [shape = 'u8[32768]{0}', space=vmem, size = 0x8000, scoped, tag = 'input window, operand 0, single buffered']
    #allocation3 [shape = 's32[1]{0}', space=sflag, size = 0x4, scoped, tag = 'scoped memory for tpu_custom_call.1']
    #allocation4 [shape = 's32[1]{0}', space=sflag, size = 0x4, scoped, tag = 'scoped memory for tpu_custom_call.1']
    #allocation5 [shape = 'u8[32768]{0}', space=vmem, size = 0x8000, scoped, tag = 'output window, operand 0, single buffered']
    %6 = vsyncpa [#allocation3], 0
    %7 = vsyncpa [#allocation4], 0
    // Predicated region
    $region2: #{tpu_custom_call.1} parent=1 // pred_check
      _
    $region3: #{tpu_custom_call.1} parent=1 // pred_check_branch
      %9 = sbr.rel (0) target = $region5
    $region4: #{tpu_custom_call.1} parent=1 // pred_region
      %s11 = ssub.s32 1024, 256
      %12 = vsyncadd [#allocation3], %s11
      %s13 = sshll.u32 [#allocation2], 4
      %s14 = int_to_ptr.vmem [resolvable:$true] %s13
      %19 = dma.hbm_to_vmem [thread:$0]  %s0, 256, %s14, [#allocation3], 256, 256, 16
    $region5: #{tpu_custom_call.1} parent=1 // pred_fallthru
      _
    // Predicated region
    $region6: #{tpu_custom_call.1} parent=1 // pred_check
      _
    $region7: #{tpu_custom_call.1} parent=1 // pred_check_branch
      %21 = sbr.rel (0) target = $region9
    $region8: #{tpu_custom_call.1} parent=1 // pred_region
      %22 = dma.done [#allocation3], 1024
    $region9: #{tpu_custom_call.1} parent=1 // pred_fallthru
      _
    %v23 = vld [vmem:[#allocation2] sm:$0xff]
    %v24 = vld [vmem:[#allocation2 + $0x8] sm:$0xff]
    %v25 = vld [vmem:[#allocation2 + $0x10] sm:$0xff]
    %v26 = vld [vmem:[#allocation2 + $0x18] sm:$0xff]
    %v27 = vld [vmem:[#allocation2 + $0x20] sm:$0xff]
    %v28 = vld [vmem:[#allocation2 + $0x28] sm:$0xff]
    %v29 = vld [vmem:[#allocation2 + $0x30] sm:$0xff]
    %v30 = vld [vmem:[#allocation2 + $0x38] sm:$0xff]
    %v31 = vxor.u32 %v23, 2147483648
    %v32 = vxor.u32 %v24, 2147483648
    %v33 = vxor.u32 %v25, 2147483648
    %v34 = vxor.u32 %v26, 2147483648
    %v35 = vxor.u32 %v27, 2147483648
    %v36 = vxor.u32 %v28, 2147483648
    %v37 = vxor.u32 %v29, 2147483648
    %v38 = vxor.u32 %v30, 2147483648
    %v39 = vmul.f32 %v31, 1.442695
    %v40 = vpow.pop %v39
    %v41 = vmul.f32 %v32, 1.442695
    %v42 = vpow.pop %v41
    %v43 = vmul.f32 %v33, 1.442695
    %v44 = vpow.pop %v43
    %v45 = vmul.f32 %v34, 1.442695
    %v46 = vpow.pop %v45
    %v47 = vmul.f32 %v35, 1.442695
    %v48 = vpow.pop %v47
    %v49 = vmul.f32 %v36, 1.442695
    %v50 = vpow.pop %v49
    %v51 = vmul.f32 %v37, 1.442695
    %v52 = vpow.pop %v51
    %v53 = vmul.f32 %v38, 1.442695
    %v54 = vpow.pop %v53
    %v55 = vadd.f32 %v40, 1.0
    %v56 = vadd.f32 %v42, 1.0
    %v57 = vadd.f32 %v44, 1.0
    %v58 = vadd.f32 %v46, 1.0
    %v59 = vadd.f32 %v48, 1.0
    %v60 = vadd.f32 %v50, 1.0
    %v61 = vadd.f32 %v52, 1.0
    %v62 = vadd.f32 %v54, 1.0
    %v63 = vrcp.pop %v55
    %v64 = vmul.f32 1.0, %v63
    %v65 = vrcp.pop %v56
    %v66 = vmul.f32 1.0, %v65
    %v67 = vrcp.pop %v57
    %v68 = vmul.f32 1.0, %v67
    %v69 = vrcp.pop %v58
    %v70 = vmul.f32 1.0, %v69
    %v71 = vrcp.pop %v59
    %v72 = vmul.f32 1.0, %v71
    %v73 = vrcp.pop %v60
    %v74 = vmul.f32 1.0, %v73
    %v75 = vrcp.pop %v61
    %v76 = vmul.f32 1.0, %v75
    %v77 = vrcp.pop %v62
    %v78 = vmul.f32 1.0, %v77
    %v79 = vmul.f32 %v23, %v64
    %v80 = vmul.f32 %v24, %v66
    %v81 = vmul.f32 %v25, %v68
    %v82 = vmul.f32 %v26, %v70
    %v83 = vmul.f32 %v27, %v72
    %v84 = vmul.f32 %v28, %v74
    %v85 = vmul.f32 %v29, %v76
    %v86 = vmul.f32 %v30, %v78
    %87 = vst [vmem:[#allocation5] sm:$0xff] %v79
    %88 = vst [vmem:[#allocation5 + $0x8] sm:$0xff] %v80
    %89 = vst [vmem:[#allocation5 + $0x10] sm:$0xff] %v81
    %90 = vst [vmem:[#allocation5 + $0x18] sm:$0xff] %v82
    %91 = vst [vmem:[#allocation5 + $0x20] sm:$0xff] %v83
    %92 = vst [vmem:[#allocation5 + $0x28] sm:$0xff] %v84
    %93 = vst [vmem:[#allocation5 + $0x30] sm:$0xff] %v85
    %94 = vst [vmem:[#allocation5 + $0x38] sm:$0xff] %v86
    // Predicated region
    $region10: #{tpu_custom_call.1} parent=1 // pred_check
      _
    $region11: #{tpu_custom_call.1} parent=1 // pred_check_branch
      %96 = sbr.rel (0) target = $region13
    $region12: #{tpu_custom_call.1} parent=1 // pred_region
      %s98 = ssub.s32 1024, 256
      %99 = vsyncadd [#allocation4], %s98
      %s100 = sshll.u32 [#allocation5], 4
      %s101 = int_to_ptr.vmem [resolvable:$true] %s100
      %106 = dma.vmem_to_hbm [thread:$0]  %s101, 256, %s1, [#allocation4], 256, 256, 16
    $region13: #{tpu_custom_call.1} parent=1 // pred_fallthru
      _
    // Predicated region
    $region14: #{tpu_custom_call.1} parent=1 // pred_check
      _
    $region15: #{tpu_custom_call.1} parent=1 // pred_check_branch
      %108 = sbr.rel (0) target = $region17
    $region16: #{tpu_custom_call.1} parent=1 // pred_region
      %109 = dma.done [#allocation4], 1024
    $region17: #{tpu_custom_call.1} parent=1 // pred_fallthru
      _
    %110 = vsyncpa [#allocation3], 1
    %111 = vsyncpa [#allocation4], 1

</llo_original>
